<compile_context>
chip_gen: v6e
topology: v6e:2x2x1
jax: 0.10.0
libtpu: 0.0.40
codegen_flags: <defaults>
</compile_context>

<pallas_src>
import math

import jax
import jax.numpy as jnp
from jax.experimental import pallas as pl
from jax.experimental.pallas import tpu as pltpu


def _fourier_kernel(x_ref, f_ref, o_ref):
    """One channel-major tile of the Fourier embedding.

    x_ref: (1, T)        timesteps, lane-dense
    f_ref: (half, 1)     pre-scaled frequencies (2*pi*f) on sublanes
    o_ref: (2*half, T)   [cos(phase); sin(phase)] stacked along channels
    """
    # Outer product via broadcast: (half, 1) * (1, T) -> (half, T), all lanes used.
    phase = f_ref[...] * x_ref[...]
    # Note (v5e): sin(p) == cos(p - pi/2) could share one range-reduction path,
    # kept as jnp.cos/jnp.sin for clarity.
    tile = jnp.concatenate([jnp.cos(phase), jnp.sin(phase)], axis=0)
    # Single full-lane-width store of the whole (2*half, T) block.
    o_ref[...] = tile.astype(o_ref.dtype)


def fourier_embedding(x, freqs_2pi, *, tile_n=8192, out_dtype=None):
    """x: (N,), freqs_2pi: (C/2,) already scaled by 2*pi. Returns (N, C)."""
    n = x.shape[0]
    half = freqs_2pi.shape[0]
    c = 2 * half
    if out_dtype is None:
        out_dtype = jnp.result_type(x.dtype, freqs_2pi.dtype)

    # Lane-axis tile must be a multiple of 128; pad N up and slice afterwards.
    tile = min(int(tile_n), pl.cdiv(n, 128) * 128)
    n_pad = pl.cdiv(n, tile) * tile

    x_pad = jnp.zeros((1, n_pad), jnp.float32).at[0, :n].set(x.astype(jnp.float32))
    f2d = freqs_2pi.reshape(half, 1).astype(jnp.float32)

    out_cm = pl.pallas_call(
        _fourier_kernel,
        out_shape=jax.ShapeDtypeStruct((c, n_pad), out_dtype),
        grid=(n_pad // tile,),
        in_specs=[
            pl.BlockSpec((1, tile), lambda i: (0, i)),      # x tile, lane-dense
            pl.BlockSpec((half, 1), lambda i: (0, 0)),      # freqs, resident
        ],
        out_specs=pl.BlockSpec((c, tile), lambda i: (0, i)),
        compiler_params=pltpu.CompilerParams(
            dimension_semantics=("parallel",),              # 2 TCs on v7x
        ),
    )(x_pad, f2d)

    # Channel-major (C, N_pad) -> row-major (N, C) to match the PyTorch forward.
    # Consumers that accept channel-major output can use out_cm[:, :n] directly.
    return out_cm[:, :n].T


class FourierEmbedding:
    """Mirrors the PyTorch module: freqs = randn(num_channels // 2) * scale."""

    def __init__(self, key, num_channels, scale=0.02):
        self.freqs = jax.random.normal(
            key, (num_channels // 2,), dtype=jnp.float32) * scale
        # Fold 2*pi into the stored buffer once at init (perf-review item);
        # the kernel never redoes this multiply per grid step.
        self._freqs_2pi = (2.0 * math.pi) * self.freqs

    def __call__(self, x):
        return fourier_embedding(x, self._freqs_2pi)


if __name__ == "__main__":
    key = jax.random.PRNGKey(0)
    k_x, k_f = jax.random.split(key)

    num_channels = 32
    scale = 0.02
    n = 8

    emb = FourierEmbedding(k_f, num_channels, scale=scale)
    # Example input: a batch of scalar timesteps
    x = jax.random.uniform(k_x, (n,), dtype=jnp.float32) * 10.0

    out = emb(x)
    out = jax.block_until_ready(out)

    # Reference check in plain JAX (same math as the PyTorch forward)
    phase_ref = x[:, None] * (2.0 * math.pi * emb.freqs[None, :])
    ref = jnp.concatenate(
        [jnp.cos(phase_ref), jnp.sin(phase_ref)], axis=1).astype(out.dtype)
    assert out.shape == (n, num_channels), out.shape
    assert jnp.allclose(out, ref, atol=1e-5), "mismatch vs reference"

    print("KERNEL_OK")
</pallas_src>

<mosaic_0001>
module attributes {stable_mosaic.version = 11 : i64} {
  func.func @_fourier_kernel(%arg0: i32, %arg1: memref<1x128xf32, #tpu.memory_space<vmem>>, %arg2: memref<16x1xf32, #tpu.memory_space<vmem>>, %arg3: memref<32x128xf32, #tpu.memory_space<vmem>>) attributes {dimension_semantics = [#tpu.dimension_semantics<parallel>], iteration_bounds = array<i64: 1>, scalar_prefetch = 0 : i64, scratch_operands = 0 : i64, tpu.core_type = #tpu.core_type<tc>, window_params = [{transform_indices = @transform_0, window_bounds = array<i64: 1, 128>}, {pipeline_mode = #tpu.pipeline_mode<synchronous>, transform_indices = @transform_1, window_bounds = array<i64: 16, 1>}, {transform_indices = @transform_2, window_bounds = array<i64: 32, 128>}]} {
    %c0 = arith.constant 0 : index
    %c0_0 = arith.constant 0 : index
    %0 = vector.load %arg2[%c0, %c0_0] : memref<16x1xf32, #tpu.memory_space<vmem>>, vector<16x1xf32>
    %c0_1 = arith.constant 0 : index
    %c0_2 = arith.constant 0 : index
    %1 = vector.load %arg1[%c0_1, %c0_2] : memref<1x128xf32, #tpu.memory_space<vmem>>, vector<1x128xf32>
    %2 = vector.broadcast %0 : vector<16x1xf32> to vector<16x128xf32>
    %3 = vector.broadcast %1 : vector<1x128xf32> to vector<16x128xf32>
    %4 = arith.mulf %2, %3 : vector<16x128xf32>
    %5 = math.cos %4 : vector<16x128xf32>
    %6 = math.sin %4 : vector<16x128xf32>
    %7 = tpu.concatenate %5, %6 in 0 : vector<16x128xf32>, vector<16x128xf32> -> vector<32x128xf32>
    %c0_3 = arith.constant 0 : index
    %c0_4 = arith.constant 0 : index
    %8 = vector.load %arg3[%c0_3, %c0_4] : memref<32x128xf32, #tpu.memory_space<vmem>>, vector<32x128xf32>
    tpu.vector_store %arg3[%c0_3, %c0_4], %7 {strides = array<i32>} : memref<32x128xf32, #tpu.memory_space<vmem>>, vector<32x128xf32>,
    return
  }
  func.func @transform_0(%arg0: i32) -> (i32, i32) {
    %c0_i32 = arith.constant 0 : i32
    %c0_i32_0 = arith.constant 0 : i32
    return %c0_i32, %arg0 : i32, i32
  }
  func.func @transform_1(%arg0: i32) -> (i32, i32) {
    %c0_i32 = arith.constant 0 : i32
    %c0_i32_0 = arith.constant 0 : i32
    %c0_i32_1 = arith.constant 0 : i32
    return %c0_i32, %c0_i32_0 : i32, i32
  }
  func.func @transform_2(%arg0: i32) -> (i32, i32) {
    %c0_i32 = arith.constant 0 : i32
    %c0_i32_0 = arith.constant 0 : i32
    return %c0_i32, %arg0 : i32, i32
  }
}

</mosaic_0001>

<llo_original>
// kernel: tpu_custom_call.1
$region0: #{tpu_custom_call.1}
  #allocation0 [shape = 'u32[]', space=smem, size = 0x4, offset = 0x4, fixed_abs, tag = 'smem constant byte address 0x4 - core index']
  #allocation1 [shape = 'u32[144,128]{1,0:T(1,128)}', space=vmem, size = 0x12000, scoped, tag = 'internal scratch']
  %s0 = inlined_call_operand.vmem [shape: f32[1,128], index: 0, kind: input, shape index: {}]
  %s1 = inlined_call_operand.vmem [shape: f32[16,1], index: 1, kind: input, shape index: {}]
  %s2 = inlined_call_operand.hbm [shape: f32[32,128], index: 2, kind: output, shape index: {}]
  %s3 = sld [smem:[#allocation0]]
  $region18: #{tpu_custom_call.1} parent=0
    _
  %s5 = ssub.s32 1, %s3
  %s6 = scalar_select 0, %s5, %s3
  $region1: #{tpu_custom_call.1} parent=0
    #allocation2 [shape = 'u8[16384]{0}', space=vmem, size = 0x4000, scoped, tag = 'output window, operand 0, single buffered']
    #allocation3 [shape = 's32[1]{0}', space=sflag, size = 0x4, scoped, tag = 'scoped memory for tpu_custom_call.1']
    %7 = vsyncpa [#allocation3], 0
    // Predicated region
    $region2: #{tpu_custom_call.1} parent=1 // pred_check
      _
    $region3: #{tpu_custom_call.1} parent=1 // pred_check_branch
      %9 = sbr.rel (0) target = $region5
    $region4: #{tpu_custom_call.1} parent=1 // pred_region
      _
    $region5: #{tpu_custom_call.1} parent=1 // pred_fallthru
      _
    // Predicated region
    $region6: #{tpu_custom_call.1} parent=1 // pred_check
      _
    $region7: #{tpu_custom_call.1} parent=1 // pred_check_branch
      %11 = sbr.rel (0) target = $region9
    $region8: #{tpu_custom_call.1} parent=1 // pred_region
      _
    $region9: #{tpu_custom_call.1} parent=1 // pred_fallthru
      _
    %v12 = vld [vmem:[%s1] sm:$0xff]
    %v13 = vld [vmem:[%s1 + $0x8] sm:$0xff]
    %v14 = vld [vmem:[%s0] sm:$0x1]
    %16 = vset.pattern.permute.xlu0 0
    %17 = vperm.xlu0 %16, %v12
    %v18 = vpop.permute.xlu0 %17
    %21 = vset.pattern.permute.xlu0 0
    %22 = vperm.xlu0 %21, %v13
    %v23 = vpop.permute.xlu0 %22
    %v26 = vlaneseq
    %v27 = vshrl.u32 %v26, 7
    %v28 = vsub.s32 0, %v27
    %v29 = vrot.slane %v14, %v28
    %v31 = vmul.f32 %v18, %v29
    %v32 = vmul.f32 %v23, %v29
    %v33 = vand.u32 2147483647, %v31
    %vm34 = vcmp.le.f32.partialorder %v33, 0.7853982
    %vm35 = vcmp.lt.s32.totalorder %v31, 0
    %v36 = vand.u32 %v31, 2139095040
    %v37 = vshrl.u32 %v36, 23
    %v38 = vsub.s32 %v37, 127
    %v39 = vand.u32 2147483647, %v31
    %v40 = vand.u32 %v39, 8388607
    %v41 = vor.u32 %v40, 8388608
    %v42 = vsub.s32 0, %v41
    %v43 = vadd.s32 %v38, 1
    %vm44 = vcmp.gt.s32.totalorder %v43, 0
    %v45 = vsel %vm44, %v43, 0
    %v46 = vshrl.u32 %v45, 5
    %v47 = vand.u32 %v45, 31
    %v48 = vsub.s32 32, %v47
    %v49 = vshrl.u32 683565275, %v48
    %v50 = vshll.u32 683565275, %v47
    %v51 = vshrl.u32 2475754826, %v48
    %v52 = vor.u32 %v50, %v51
    %v53 = vshll.u32 2475754826, %v47
    %v54 = vshrl.u32 2131351028, %v48
    %v55 = vor.u32 %v53, %v54
    %v56 = vshll.u32 2131351028, %v47
    %v57 = vshrl.u32 2102212464, %v48
    %v58 = vor.u32 %v56, %v57
    %v59 = vshll.u32 2102212464, %v47
    %v60 = vshrl.u32 920167782, %v48
    %v61 = vor.u32 %v59, %v60
    %v62 = vshll.u32 920167782, %v47
    %v63 = vshrl.u32 1326507024, %v48
    %v64 = vor.u32 %v62, %v63
    %vm65 = vcmp.lt.s32.totalorder %v46, 1
    %vm66 = vcmp.lt.s32.totalorder %v46, 2
    %vm67 = vcmp.lt.s32.totalorder %v46, 3
    %vm68 = vcmp.lt.s32.totalorder %v46, 4
    %v69 = vsel %vm65, %v49, %v52
    %v70 = vsel %vm68, %v58, 2102212464
    %v71 = vsel %vm67, %v55, %v70
    %v72 = vsel %vm66, %v69, %v71
    %v73 = vsel %vm65, %v52, %v55
    %v74 = vsel %vm68, %v61, 920167782
    %v75 = vsel %vm67, %v58, %v74
    %v76 = vsel %vm66, %v73, %v75
    %v77 = vsel %vm65, %v55, %v58
    %v78 = vsel %vm68, %v64, 1326507024
    %v79 = vsel %vm67, %v61, %v78
    %v80 = vsel %vm66, %v77, %v79
    %v81 = vshll.u32 %v41, 8
    %v82 = vmul.u32.u64.compose %v81, %v80
    %v83 = vextract.low.u32 %v82
    %v84 = vextract.high.u32 %v82
    %v85 = vmul.u32.u64.compose %v81, %v76
    %v86 = vextract.low.u32 %v85
    %v87 = vextract.high.u32 %v85
    %v88 = vmul.u32 %v81, %v72
    %v89 = vadd.s32 %v84, %v86
    %vm90 = vc.u32 %v84, %v86
    %v91 = vadd.s32 %v87, 1
    %v92 = vsel %vm90, %v91, %v87
    %v93 = vadd.s32 %v88, %v92
    %v94 = vadd.s32 %v93, 536870912
    %v95 = vshrl.u32 %v94, 30
    %v96 = vshll.u32 %v95, 30
    %v97 = vsub.s32 %v93, %v96
    %vm98 = vcmp.lt.s32.totalorder %v97, 0
    %v99 = vsub.s32 0, %v97
    %v100 = vsel %vm98, %v99, %v97
    %v101 = vclz %v100
    %v102 = vsub.s32 %v101, 2
    %vm103 = vcmp.gt.s32.totalorder 0, %v102
    %v104 = vsel %vm103, 0, %v102
    %v105 = vsub.s32 32, %v104
    %v106 = vshll.u32 %v97, %v104
    %v107 = vshrl.u32 %v89, %v105
    %v108 = vor.u32 %v106, %v107
    %v109 = vsub.s32 4294967266, %v104
    %v110 = vadd.s32 %v109, 127
    %v111 = vshll.u32 %v110, 23
    %v112 = vor.u32 4788187, %v111
    %v113 = vand.u32 2147483647, %v112
    %v115 = vcvt.s32.f32 %v108
    %v116 = vmul.f32 %v115, %v113
    %v117 = vxor.u32 %v116, 2147483648
    %v118 = vsel %vm35, %v117, %v116
    %v119 = vsub.s32 4, %v95
    %v120 = vsel %vm35, %v119, %v95
    %v121 = vsel %vm34, %v31, %v118
    %v122 = vsel %vm34, 0, %v120
    %v123 = vcosq.f32.pop %v121
    %v124 = vsinq.f32.pop %v121
    %vm125 = vweird.f32 %v31
    %v126 = vand.u32 %v122, 3
    %vm127 = vcmp.lt.s32.totalorder %v126, 2
    %vm128 = vcmp.eq.s32.totalorder %v126, 0
    %v129 = vxor.u32 %v124, 2147483648
    %v130 = vsel %vm128, %v123, %v129
    %vm131 = vcmp.eq.s32.totalorder %v126, 2
    %v132 = vxor.u32 %v123, 2147483648
    %v133 = vsel %vm131, %v132, %v124
    %v134 = vsel %vm127, %v130, %v133
    %v135 = vsel %vm125, nan, %v134
    %v136 = vand.u32 2147483647, %v32
    %vm137 = vcmp.le.f32.partialorder %v136, 0.7853982
    %vm138 = vcmp.lt.s32.totalorder %v32, 0
    %v139 = vand.u32 %v32, 2139095040
    %v140 = vshrl.u32 %v139, 23
    %v141 = vsub.s32 %v140, 127
    %v142 = vand.u32 2147483647, %v32
    %v143 = vand.u32 %v142, 8388607
    %v144 = vor.u32 %v143, 8388608
    %v145 = vsub.s32 0, %v144
    %v146 = vadd.s32 %v141, 1
    %vm147 = vcmp.gt.s32.totalorder %v146, 0
    %v148 = vsel %vm147, %v146, 0
    %v149 = vshrl.u32 %v148, 5
    %v150 = vand.u32 %v148, 31
    %v151 = vsub.s32 32, %v150
    %v152 = vshrl.u32 683565275, %v151
    %v153 = vshll.u32 683565275, %v150
    %v154 = vshrl.u32 2475754826, %v151
    %v155 = vor.u32 %v153, %v154
    %v156 = vshll.u32 2475754826, %v150
    %v157 = vshrl.u32 2131351028, %v151
    %v158 = vor.u32 %v156, %v157
    %v159 = vshll.u32 2131351028, %v150
    %v160 = vshrl.u32 2102212464, %v151
    %v161 = vor.u32 %v159, %v160
    %v162 = vshll.u32 2102212464, %v150
    %v163 = vshrl.u32 920167782, %v151
    %v164 = vor.u32 %v162, %v163
    %v165 = vshll.u32 920167782, %v150
    %v166 = vshrl.u32 1326507024, %v151
    %v167 = vor.u32 %v165, %v166
    %vm168 = vcmp.lt.s32.totalorder %v149, 1
    %vm169 = vcmp.lt.s32.totalorder %v149, 2
    %vm170 = vcmp.lt.s32.totalorder %v149, 3
    %vm171 = vcmp.lt.s32.totalorder %v149, 4
    %v172 = vsel %vm168, %v152, %v155
    %v173 = vsel %vm171, %v161, 2102212464
    %v174 = vsel %vm170, %v158, %v173
    %v175 = vsel %vm169, %v172, %v174
    %v176 = vsel %vm168, %v155, %v158
    %v177 = vsel %vm171, %v164, 920167782
    %v178 = vsel %vm170, %v161, %v177
    %v179 = vsel %vm169, %v176, %v178
    %v180 = vsel %vm168, %v158, %v161
    %v181 = vsel %vm171, %v167, 1326507024
    %v182 = vsel %vm170, %v164, %v181
    %v183 = vsel %vm169, %v180, %v182
    %v184 = vshll.u32 %v144, 8
    %v185 = vmul.u32.u64.compose %v184, %v183
    %v186 = vextract.low.u32 %v185
    %v187 = vextract.high.u32 %v185
    %v188 = vmul.u32.u64.compose %v184, %v179
    %v189 = vextract.low.u32 %v188
    %v190 = vextract.high.u32 %v188
    %v191 = vmul.u32 %v184, %v175
    %v192 = vadd.s32 %v187, %v189
    %vm193 = vc.u32 %v187, %v189
    %v194 = vadd.s32 %v190, 1
    %v195 = vsel %vm193, %v194, %v190
    %v196 = vadd.s32 %v191, %v195
    %v197 = vadd.s32 %v196, 536870912
    %v198 = vshrl.u32 %v197, 30
    %v199 = vshll.u32 %v198, 30
    %v200 = vsub.s32 %v196, %v199
    %vm201 = vcmp.lt.s32.totalorder %v200, 0
    %v202 = vsub.s32 0, %v200
    %v203 = vsel %vm201, %v202, %v200
    %v204 = vclz %v203
    %v205 = vsub.s32 %v204, 2
    %vm206 = vcmp.gt.s32.totalorder 0, %v205
    %v207 = vsel %vm206, 0, %v205
    %v208 = vsub.s32 32, %v207
    %v209 = vshll.u32 %v200, %v207
    %v210 = vshrl.u32 %v192, %v208
    %v211 = vor.u32 %v209, %v210
    %v212 = vsub.s32 4294967266, %v207
    %v213 = vadd.s32 %v212, 127
    %v214 = vshll.u32 %v213, 23
    %v215 = vor.u32 4788187, %v214
    %v216 = vand.u32 2147483647, %v215
    %v218 = vcvt.s32.f32 %v211
    %v219 = vmul.f32 %v218, %v216
    %v220 = vxor.u32 %v219, 2147483648
    %v221 = vsel %vm138, %v220, %v219
    %v222 = vsub.s32 4, %v198
    %v223 = vsel %vm138, %v222, %v198
    %v224 = vsel %vm137, %v32, %v221
    %v225 = vsel %vm137, 0, %v223
    %v226 = vcosq.f32.pop %v224
    %v227 = vsinq.f32.pop %v224
    %vm228 = vweird.f32 %v32
    %v229 = vand.u32 %v225, 3
    %vm230 = vcmp.lt.s32.totalorder %v229, 2
    %vm231 = vcmp.eq.s32.totalorder %v229, 0
    %v232 = vxor.u32 %v227, 2147483648
    %v233 = vsel %vm231, %v226, %v232
    %vm234 = vcmp.eq.s32.totalorder %v229, 2
    %v235 = vxor.u32 %v226, 2147483648
    %v236 = vsel %vm234, %v235, %v227
    %v237 = vsel %vm230, %v233, %v236
    %v238 = vsel %vm228, nan, %v237
    %v239 = vand.u32 2147483647, %v31
    %vm240 = vcmp.le.f32.partialorder %v239, 0.7853982
    %vm241 = vcmp.lt.s32.totalorder %v31, 0
    %v242 = vand.u32 %v31, 2139095040
    %v243 = vshrl.u32 %v242, 23
    %v244 = vsub.s32 %v243, 127
    %v245 = vand.u32 2147483647, %v31
    %v246 = vand.u32 %v245, 8388607
    %v247 = vor.u32 %v246, 8388608
    %v248 = vsub.s32 0, %v247
    %v249 = vadd.s32 %v244, 1
    %vm250 = vcmp.gt.s32.totalorder %v249, 0
    %v251 = vsel %vm250, %v249, 0
    %v252 = vshrl.u32 %v251, 5
    %v253 = vand.u32 %v251, 31
    %v254 = vsub.s32 32, %v253
    %v255 = vshrl.u32 683565275, %v254
    %v256 = vshll.u32 683565275, %v253
    %v257 = vshrl.u32 2475754826, %v254
    %v258 = vor.u32 %v256, %v257
    %v259 = vshll.u32 2475754826, %v253
    %v260 = vshrl.u32 2131351028, %v254
    %v261 = vor.u32 %v259, %v260
    %v262 = vshll.u32 2131351028, %v253
    %v263 = vshrl.u32 2102212464, %v254
    %v264 = vor.u32 %v262, %v263
    %v265 = vshll.u32 2102212464, %v253
    %v266 = vshrl.u32 920167782, %v254
    %v267 = vor.u32 %v265, %v266
    %v268 = vshll.u32 920167782, %v253
    %v269 = vshrl.u32 1326507024, %v254
    %v270 = vor.u32 %v268, %v269
    %vm271 = vcmp.lt.s32.totalorder %v252, 1
    %vm272 = vcmp.lt.s32.totalorder %v252, 2
    %vm273 = vcmp.lt.s32.totalorder %v252, 3
    %vm274 = vcmp.lt.s32.totalorder %v252, 4
    %v275 = vsel %vm271, %v255, %v258
    %v276 = vsel %vm274, %v264, 2102212464
    %v277 = vsel %vm273, %v261, %v276
    %v278 = vsel %vm272, %v275, %v277
    %v279 = vsel %vm271, %v258, %v261
    %v280 = vsel %vm274, %v267, 920167782
    %v281 = vsel %vm273, %v264, %v280
    %v282 = vsel %vm272, %v279, %v281
    %v283 = vsel %vm271, %v261, %v264
    %v284 = vsel %vm274, %v270, 1326507024
    %v285 = vsel %vm273, %v267, %v284
    %v286 = vsel %vm272, %v283, %v285
    %v287 = vshll.u32 %v247, 8
    %v288 = vmul.u32.u64.compose %v287, %v286
    %v289 = vextract.low.u32 %v288
    %v290 = vextract.high.u32 %v288
    %v291 = vmul.u32.u64.compose %v287, %v282
    %v292 = vextract.low.u32 %v291
    %v293 = vextract.high.u32 %v291
    %v294 = vmul.u32 %v287, %v278
    %v295 = vadd.s32 %v290, %v292
    %vm296 = vc.u32 %v290, %v292
    %v297 = vadd.s32 %v293, 1
    %v298 = vsel %vm296, %v297, %v293
    %v299 = vadd.s32 %v294, %v298
    %v300 = vadd.s32 %v299, 536870912
    %v301 = vshrl.u32 %v300, 30
    %v302 = vshll.u32 %v301, 30
    %v303 = vsub.s32 %v299, %v302
    %vm304 = vcmp.lt.s32.totalorder %v303, 0
    %v305 = vsub.s32 0, %v303
    %v306 = vsel %vm304, %v305, %v303
    %v307 = vclz %v306
    %v308 = vsub.s32 %v307, 2
    %vm309 = vcmp.gt.s32.totalorder 0, %v308
    %v310 = vsel %vm309, 0, %v308
    %v311 = vsub.s32 32, %v310
    %v312 = vshll.u32 %v303, %v310
    %v313 = vshrl.u32 %v295, %v311
    %v314 = vor.u32 %v312, %v313
    %v315 = vsub.s32 4294967266, %v310
    %v316 = vadd.s32 %v315, 127
    %v317 = vshll.u32 %v316, 23
    %v318 = vor.u32 4788187, %v317
    %v319 = vand.u32 2147483647, %v318
    %v321 = vcvt.s32.f32 %v314
    %v322 = vmul.f32 %v321, %v319
    %v323 = vxor.u32 %v322, 2147483648
    %v324 = vsel %vm241, %v323, %v322
    %v325 = vsub.s32 4, %v301
    %v326 = vsel %vm241, %v325, %v301
    %v327 = vsel %vm240, %v31, %v324
    %v328 = vsel %vm240, 0, %v326
    %v329 = vcosq.f32.pop %v327
    %v330 = vsinq.f32.pop %v327
    %vm331 = vweird.f32 %v31
    %v332 = vadd.s32 %v328, 3
    %v333 = vand.u32 %v332, 3
    %vm334 = vcmp.lt.s32.totalorder %v333, 2
    %vm335 = vcmp.eq.s32.totalorder %v333, 0
    %v336 = vxor.u32 %v330, 2147483648
    %v337 = vsel %vm335, %v329, %v336
    %vm338 = vcmp.eq.s32.totalorder %v333, 2
    %v339 = vxor.u32 %v329, 2147483648
    %v340 = vsel %vm338, %v339, %v330
    %v341 = vsel %vm334, %v337, %v340
    %v342 = vsel %vm331, nan, %v341
    %v343 = vand.u32 2147483647, %v32
    %vm344 = vcmp.le.f32.partialorder %v343, 0.7853982
    %vm345 = vcmp.lt.s32.totalorder %v32, 0
    %v346 = vand.u32 %v32, 2139095040
    %v347 = vshrl.u32 %v346, 23
    %v348 = vsub.s32 %v347, 127
    %v349 = vand.u32 2147483647, %v32
    %v350 = vand.u32 %v349, 8388607
    %v351 = vor.u32 %v350, 8388608
    %v352 = vsub.s32 0, %v351
    %v353 = vadd.s32 %v348, 1
    %vm354 = vcmp.gt.s32.totalorder %v353, 0
    %v355 = vsel %vm354, %v353, 0
    %v356 = vshrl.u32 %v355, 5
    %v357 = vand.u32 %v355, 31
    %v358 = vsub.s32 32, %v357
    %v359 = vshrl.u32 683565275, %v358
    %v360 = vshll.u32 683565275, %v357
    %v361 = vshrl.u32 2475754826, %v358
    %v362 = vor.u32 %v360, %v361
    %v363 = vshll.u32 2475754826, %v357
    %v364 = vshrl.u32 2131351028, %v358
    %v365 = vor.u32 %v363, %v364
    %v366 = vshll.u32 2131351028, %v357
    %v367 = vshrl.u32 2102212464, %v358
    %v368 = vor.u32 %v366, %v367
    %v369 = vshll.u32 2102212464, %v357
    %v370 = vshrl.u32 920167782, %v358
    %v371 = vor.u32 %v369, %v370
    %v372 = vshll.u32 920167782, %v357
    %v373 = vshrl.u32 1326507024, %v358
    %v374 = vor.u32 %v372, %v373
    %vm375 = vcmp.lt.s32.totalorder %v356, 1
    %vm376 = vcmp.lt.s32.totalorder %v356, 2
    %vm377 = vcmp.lt.s32.totalorder %v356, 3
    %vm378 = vcmp.lt.s32.totalorder %v356, 4
    %v379 = vsel %vm375, %v359, %v362
    %v380 = vsel %vm378, %v368, 2102212464
    %v381 = vsel %vm377, %v365, %v380
    %v382 = vsel %vm376, %v379, %v381
    %v383 = vsel %vm375, %v362, %v365
    %v384 = vsel %vm378, %v371, 920167782
    %v385 = vsel %vm377, %v368, %v384
    %v386 = vsel %vm376, %v383, %v385
    %v387 = vsel %vm375, %v365, %v368
    %v388 = vsel %vm378, %v374, 1326507024
    %v389 = vsel %vm377, %v371, %v388
    %v390 = vsel %vm376, %v387, %v389
    %v391 = vshll.u32 %v351, 8
    %v392 = vmul.u32.u64.compose %v391, %v390
    %v393 = vextract.low.u32 %v392
    %v394 = vextract.high.u32 %v392
    %v395 = vmul.u32.u64.compose %v391, %v386
    %v396 = vextract.low.u32 %v395
    %v397 = vextract.high.u32 %v395
    %v398 = vmul.u32 %v391, %v382
    %v399 = vadd.s32 %v394, %v396
    %vm400 = vc.u32 %v394, %v396
    %v401 = vadd.s32 %v397, 1
    %v402 = vsel %vm400, %v401, %v397
    %v403 = vadd.s32 %v398, %v402
    %v404 = vadd.s32 %v403, 536870912
    %v405 = vshrl.u32 %v404, 30
    %v406 = vshll.u32 %v405, 30
    %v407 = vsub.s32 %v403, %v406
    %vm408 = vcmp.lt.s32.totalorder %v407, 0
    %v409 = vsub.s32 0, %v407
    %v410 = vsel %vm408, %v409, %v407
    %v411 = vclz %v410
    %v412 = vsub.s32 %v411, 2
    %vm413 = vcmp.gt.s32.totalorder 0, %v412
    %v414 = vsel %vm413, 0, %v412
    %v415 = vsub.s32 32, %v414
    %v416 = vshll.u32 %v407, %v414
    %v417 = vshrl.u32 %v399, %v415
    %v418 = vor.u32 %v416, %v417
    %v419 = vsub.s32 4294967266, %v414
    %v420 = vadd.s32 %v419, 127
    %v421 = vshll.u32 %v420, 23
    %v422 = vor.u32 4788187, %v421
    %v423 = vand.u32 2147483647, %v422
    %v425 = vcvt.s32.f32 %v418
    %v426 = vmul.f32 %v425, %v423
    %v427 = vxor.u32 %v426, 2147483648
    %v428 = vsel %vm345, %v427, %v426
    %v429 = vsub.s32 4, %v405
    %v430 = vsel %vm345, %v429, %v405
    %v431 = vsel %vm344, %v32, %v428
    %v432 = vsel %vm344, 0, %v430
    %v433 = vcosq.f32.pop %v431
    %v434 = vsinq.f32.pop %v431
    %vm435 = vweird.f32 %v32
    %v436 = vadd.s32 %v432, 3
    %v437 = vand.u32 %v436, 3
    %vm438 = vcmp.lt.s32.totalorder %v437, 2
    %vm439 = vcmp.eq.s32.totalorder %v437, 0
    %v440 = vxor.u32 %v434, 2147483648
    %v441 = vsel %vm439, %v433, %v440
    %vm442 = vcmp.eq.s32.totalorder %v437, 2
    %v443 = vxor.u32 %v433, 2147483648
    %v444 = vsel %vm442, %v443, %v434
    %v445 = vsel %vm438, %v441, %v444
    %v446 = vsel %vm435, nan, %v445
    %447 = vst [vmem:[#allocation2] sm:$0xff] %v135
    %448 = vst [vmem:[#allocation2 + $0x8] sm:$0xff] %v238
    %449 = vst [vmem:[#allocation2 + $0x10] sm:$0xff] %v342
    %450 = vst [vmem:[#allocation2 + $0x18] sm:$0xff] %v446
    // Predicated region
    $region10: #{tpu_custom_call.1} parent=1 // pred_check
      _
    $region11: #{tpu_custom_call.1} parent=1 // pred_check_branch
      %452 = sbr.rel (0) target = $region13
    $region12: #{tpu_custom_call.1} parent=1 // pred_region
      %s454 = ssub.s32 512, 512
      %455 = vsyncadd [#allocation3], %s454
      %s456 = sshll.u32 [#allocation2], 4
      %s457 = int_to_ptr.vmem [resolvable:$true] %s456
      %462 = dma.vmem_to_hbm [thread:$0]  %s457, 512, %s2, [#allocation3], 128, 128, 8
    $region13: #{tpu_custom_call.1} parent=1 // pred_fallthru
      _
    // Predicated region
    $region14: #{tpu_custom_call.1} parent=1 // pred_check
      _
    $region15: #{tpu_custom_call.1} parent=1 // pred_check_branch
      %464 = sbr.rel (0) target = $region17
    $region16: #{tpu_custom_call.1} parent=1 // pred_region
      %465 = dma.done [#allocation3], 512
    $region17: #{tpu_custom_call.1} parent=1 // pred_fallthru
      _
    %466 = vsyncpa [#allocation3], 1

</llo_original>
